<compile_context>
chip_gen: v7x
topology: tpu7x:2x2x1
jax: 0.10.0
libtpu: 0.0.40
codegen_flags: <defaults>
</compile_context>

<pallas_src>
import jax
import jax.numpy as jnp
from jax.experimental import pallas as pl
from jax.experimental.pallas import tpu as pltpu

LOG_STD_MIN = -20.0
LOG_STD_MAX = 0.0


def actor_kernel(state_ref, wh_ref, bh_ref, whead_ref, bhead_ref, eps_ref,
                 out_ref):
    A = eps_ref.shape[-1]

    # hidden = relu(state @ Wh + bh)      (bias broadcasts (1,H) -> (tb,H))
    x = jnp.dot(state_ref[...], wh_ref[...], preferred_element_type=jnp.float32)
    x = jnp.maximum(x + bh_ref[...], 0.0)

    # Fused heads: one MXU matmul yields [mu_pre | log_std_pre]; one tanh
    # (EUP slot) covers both halves at once.
    h = jnp.tanh(
        jnp.dot(x, whead_ref[...], preferred_element_type=jnp.float32)
        + bhead_ref[...])

    mu = h[:, :A]
    log_std = LOG_STD_MIN + 0.5 * (LOG_STD_MAX - LOG_STD_MIN) * (h[:, A:] + 1.0)
    std = jnp.exp(log_std)

    # Normal(mu, std).sample() == mu + std * eps,  eps ~ N(0, 1) (host-provided
    # reparameterization noise standing in for torch.distributions sampling).
    action = mu + std * eps_ref[...]

    # Single coalesced output slab: [action; mu; std] -> one writeback per tile.
    out_ref[0] = action
    out_ref[1] = mu
    out_ref[2] = std


def actor_forward(state, params, eps, *, block_b=128):
    """Actor forward pass. Returns (action, mu, std); mu/std parameterize the
    Normal distribution that the PyTorch module returns as `dist`.
    """
    B, S = state.shape
    H = params["w_h"].shape[1]
    A = params["w_mu"].shape[1]

    # Fuse the two heads on the host (weights are static; XLA hoists this).
    w_head = jnp.concatenate([params["w_mu"], params["w_ls"]], axis=1)  # (H, 2A)
    b_head = jnp.concatenate([params["b_mu"], params["b_ls"]], axis=1)  # (1, 2A)

    # Batch tiling: 128-row tiles when the batch is large, otherwise a single
    # whole-batch block (block == full dim satisfies the (8,128) rule).
    tb = block_b if B >= block_b else B
    n_blocks = pl.cdiv(B, tb)
    Bp = n_blocks * tb
    if Bp != B:
        pad = Bp - B
        state = jnp.pad(state, ((0, pad), (0, 0)))
        eps = jnp.pad(eps, ((0, pad), (0, 0)))

    out = pl.pallas_call(
        actor_kernel,
        out_shape=jax.ShapeDtypeStruct((3, Bp, A), jnp.float32),
        grid=(n_blocks,),
        in_specs=[
            pl.BlockSpec((tb, S), lambda i: (i, 0)),       # state tile
            pl.BlockSpec((S, H), lambda i: (0, 0)),        # w_h   (VMEM-resident)
            pl.BlockSpec((1, H), lambda i: (0, 0)),        # b_h   (VMEM-resident)
            pl.BlockSpec((H, 2 * A), lambda i: (0, 0)),    # fused head weights
            pl.BlockSpec((1, 2 * A), lambda i: (0, 0)),    # fused head bias
            pl.BlockSpec((tb, A), lambda i: (i, 0)),       # eps tile
        ],
        out_specs=pl.BlockSpec((3, tb, A), lambda i: (0, i, 0)),
        compiler_params=pltpu.CompilerParams(
            dimension_semantics=("parallel",)),   # megacore sharding on v7x
    )(state, params["w_h"], params["b_h"], w_head, b_head, eps)

    action = out[0, :B]
    mu = out[1, :B]
    std = out[2, :B]
    return action, mu, std


def init_params(key, state_size, action_size, hidden=128, init_w=0.003):
    """Parameter init mirroring the PyTorch module.

    hidden layer: default nn.Linear init U(-1/sqrt(fan_in), 1/sqrt(fan_in));
    mu / log_std layers: initialize_uniformly -> U(-0.003, 0.003).
    Weights are stored transposed: shape (in_features, out_features).
    """
    k = jax.random.split(key, 6)
    bound = 1.0 / jnp.sqrt(jnp.float32(state_size))
    return {
        "w_h":  jax.random.uniform(k[0], (state_size, hidden), jnp.float32, -bound, bound),
        "b_h":  jax.random.uniform(k[1], (1, hidden), jnp.float32, -bound, bound),
        "w_mu": jax.random.uniform(k[2], (hidden, action_size), jnp.float32, -init_w, init_w),
        "b_mu": jax.random.uniform(k[3], (1, action_size), jnp.float32, -init_w, init_w),
        "w_ls": jax.random.uniform(k[4], (hidden, action_size), jnp.float32, -init_w, init_w),
        "b_ls": jax.random.uniform(k[5], (1, action_size), jnp.float32, -init_w, init_w),
    }


if __name__ == "__main__":
    key = jax.random.PRNGKey(0)
    k_params, k_state, k_eps = jax.random.split(key, 3)

    # Small deterministic problem consistent with the module:
    # a handful of env states, state_size=16, action_size=4, hidden=128 (fixed).
    batch = 8
    state_size = 16
    action_size = 4

    params = init_params(k_params, state_size, action_size)
    state = jax.random.normal(k_state, (batch, state_size), jnp.float32)
    # Standard-normal noise for the reparameterized Normal(mu, std) sample.
    eps = jax.random.normal(k_eps, (batch, action_size), jnp.float32)

    action, mu, std = actor_forward(state, params, eps)
    jax.block_until_ready((action, mu, std))

    # Pure-JAX reference of the same forward math (unfused weights).
    x_ref = jnp.maximum(state @ params["w_h"] + params["b_h"], 0.0)
    mu_ref = jnp.tanh(x_ref @ params["w_mu"] + params["b_mu"])
    ls_ref = jnp.tanh(x_ref @ params["w_ls"] + params["b_ls"])
    ls_ref = LOG_STD_MIN + 0.5 * (LOG_STD_MAX - LOG_STD_MIN) * (ls_ref + 1.0)
    std_ref = jnp.exp(ls_ref)
    act_ref = mu_ref + std_ref * eps

    # 1e-4 tolerance: TPU MXU f32 dots use bf16-pass precision by default.
    assert jnp.allclose(mu, mu_ref, atol=1e-4), "mu mismatch"
    assert jnp.allclose(std, std_ref, atol=1e-4), "std mismatch"
    assert jnp.allclose(action, act_ref, atol=1e-4), "action mismatch"

    print("KERNEL_OK")
</pallas_src>

<mosaic_0001>
module attributes {stable_mosaic.version = 11 : i64} {
  func.func @actor_kernel(%arg0: i32, %arg1: memref<8x16xf32, #tpu.memory_space<vmem>>, %arg2: memref<16x128xf32, #tpu.memory_space<vmem>>, %arg3: memref<1x128xf32, #tpu.memory_space<vmem>>, %arg4: memref<128x8xf32, #tpu.memory_space<vmem>>, %arg5: memref<1x8xf32, #tpu.memory_space<vmem>>, %arg6: memref<8x4xf32, #tpu.memory_space<vmem>>, %arg7: memref<3x8x4xf32, #tpu.memory_space<vmem>>) attributes {dimension_semantics = [#tpu.dimension_semantics<parallel>], iteration_bounds = array<i64: 1>, scalar_prefetch = 0 : i64, scratch_operands = 0 : i64, tpu.core_type = #tpu.core_type<tc>, window_params = [{transform_indices = @transform_0, window_bounds = array<i64: 8, 16>}, {pipeline_mode = #tpu.pipeline_mode<synchronous>, transform_indices = @transform_1, window_bounds = array<i64: 16, 128>}, {pipeline_mode = #tpu.pipeline_mode<synchronous>, transform_indices = @transform_2, window_bounds = array<i64: 1, 128>}, {pipeline_mode = #tpu.pipeline_mode<synchronous>, transform_indices = @transform_3, window_bounds = array<i64: 128, 8>}, {pipeline_mode = #tpu.pipeline_mode<synchronous>, transform_indices = @transform_4, window_bounds = array<i64: 1, 8>}, {transform_indices = @transform_5, window_bounds = array<i64: 8, 4>}, {transform_indices = @transform_6, window_bounds = array<i64: 3, 8, 4>}]} {
    %c0 = arith.constant 0 : index
    %c0_0 = arith.constant 0 : index
    %0 = vector.load %arg1[%c0, %c0_0] : memref<8x16xf32, #tpu.memory_space<vmem>>, vector<8x16xf32>
    %c0_1 = arith.constant 0 : index
    %c0_2 = arith.constant 0 : index
    %1 = vector.load %arg2[%c0_1, %c0_2] : memref<16x128xf32, #tpu.memory_space<vmem>>, vector<16x128xf32>
    %cst = arith.constant dense<0.000000e+00> : vector<8x128xf32>
    %2 = tpu.matmul %0, %1, %cst {dimension_numbers = #tpu.dot_dimension_numbers<[1], [0], [0], [1], [0, 0, 1, 1], [], []>} : vector<8x16xf32>, vector<16x128xf32>, vector<8x128xf32> -> vector<8x128xf32>
    %c0_3 = arith.constant 0 : index
    %c0_4 = arith.constant 0 : index
    %3 = vector.load %arg3[%c0_3, %c0_4] : memref<1x128xf32, #tpu.memory_space<vmem>>, vector<1x128xf32>
    %4 = vector.broadcast %3 : vector<1x128xf32> to vector<8x128xf32>
    %5 = arith.addf %2, %4 : vector<8x128xf32>
    %cst_5 = arith.constant 0.000000e+00 : f32
    %6 = vector.broadcast %cst_5 : f32 to vector<8x128xf32>
    %7 = arith.maximumf %5, %6 : vector<8x128xf32>
    %c0_6 = arith.constant 0 : index
    %c0_7 = arith.constant 0 : index
    %8 = vector.load %arg4[%c0_6, %c0_7] : memref<128x8xf32, #tpu.memory_space<vmem>>, vector<128x8xf32>
    %cst_8 = arith.constant dense<0.000000e+00> : vector<8x8xf32>
    %9 = tpu.matmul %7, %8, %cst_8 {dimension_numbers = #tpu.dot_dimension_numbers<[1], [0], [0], [1], [0, 0, 1, 1], [], []>} : vector<8x128xf32>, vector<128x8xf32>, vector<8x8xf32> -> vector<8x8xf32>
    %c0_9 = arith.constant 0 : index
    %c0_10 = arith.constant 0 : index
    %10 = vector.load %arg5[%c0_9, %c0_10] : memref<1x8xf32, #tpu.memory_space<vmem>>, vector<1x8xf32>
    %11 = vector.broadcast %10 : vector<1x8xf32> to vector<8x8xf32>
    %12 = arith.addf %9, %11 : vector<8x8xf32>
    %13 = math.tanh %12 : vector<8x8xf32>
    %14 = vector.extract_strided_slice %13 {offsets = [0, 0], sizes = [8, 4], strides = [1, 1]} : vector<8x8xf32> to vector<8x4xf32>
    %15 = vector.extract_strided_slice %13 {offsets = [0, 4], sizes = [8, 4], strides = [1, 1]} : vector<8x8xf32> to vector<8x4xf32>
    %cst_11 = arith.constant 1.000000e+00 : f32
    %16 = vector.broadcast %cst_11 : f32 to vector<8x4xf32>
    %17 = arith.addf %15, %16 : vector<8x4xf32>
    %cst_12 = arith.constant 1.000000e+01 : f32
    %18 = vector.broadcast %cst_12 : f32 to vector<8x4xf32>
    %19 = arith.mulf %18, %17 : vector<8x4xf32>
    %cst_13 = arith.constant -2.000000e+01 : f32
    %20 = vector.broadcast %cst_13 : f32 to vector<8x4xf32>
    %21 = arith.addf %20, %19 : vector<8x4xf32>
    %22 = math.exp %21 : vector<8x4xf32>
    %c0_14 = arith.constant 0 : index
    %c0_15 = arith.constant 0 : index
    %23 = vector.load %arg6[%c0_14, %c0_15] : memref<8x4xf32, #tpu.memory_space<vmem>>, vector<8x4xf32>
    %24 = arith.mulf %22, %23 : vector<8x4xf32>
    %25 = arith.addf %14, %24 : vector<8x4xf32>
    %c0_16 = arith.constant 0 : index
    %c0_17 = arith.constant 0 : index
    %c0_18 = arith.constant 0 : index
    %26 = vector.load %arg7[%c0_16, %c0_17, %c0_18] : memref<3x8x4xf32, #tpu.memory_space<vmem>>, vector<1x8x4xf32>
    %27 = vector.shape_cast %26 : vector<1x8x4xf32> to vector<8x4xf32>
    %28 = vector.shape_cast %25 : vector<8x4xf32> to vector<1x8x4xf32>
    tpu.vector_store %arg7[%c0_16, %c0_17, %c0_18], %28 {strides = array<i32>} : memref<3x8x4xf32, #tpu.memory_space<vmem>>, vector<1x8x4xf32>,
    %c1 = arith.constant 1 : index
    %c0_19 = arith.constant 0 : index
    %c0_20 = arith.constant 0 : index
    %29 = vector.load %arg7[%c1, %c0_19, %c0_20] : memref<3x8x4xf32, #tpu.memory_space<vmem>>, vector<1x8x4xf32>
    %30 = vector.shape_cast %29 : vector<1x8x4xf32> to vector<8x4xf32>
    %31 = vector.shape_cast %14 : vector<8x4xf32> to vector<1x8x4xf32>
    tpu.vector_store %arg7[%c1, %c0_19, %c0_20], %31 {strides = array<i32>} : memref<3x8x4xf32, #tpu.memory_space<vmem>>, vector<1x8x4xf32>,
    %c2 = arith.constant 2 : index
    %c0_21 = arith.constant 0 : index
    %c0_22 = arith.constant 0 : index
    %32 = vector.load %arg7[%c2, %c0_21, %c0_22] : memref<3x8x4xf32, #tpu.memory_space<vmem>>, vector<1x8x4xf32>
    %33 = vector.shape_cast %32 : vector<1x8x4xf32> to vector<8x4xf32>
    %34 = vector.shape_cast %22 : vector<8x4xf32> to vector<1x8x4xf32>
    tpu.vector_store %arg7[%c2, %c0_21, %c0_22], %34 {strides = array<i32>} : memref<3x8x4xf32, #tpu.memory_space<vmem>>, vector<1x8x4xf32>,
    return
  }
  func.func @transform_0(%arg0: i32) -> (i32, i32) {
    %c0_i32 = arith.constant 0 : i32
    %c0_i32_0 = arith.constant 0 : i32
    return %arg0, %c0_i32 : i32, i32
  }
  func.func @transform_1(%arg0: i32) -> (i32, i32) {
    %c0_i32 = arith.constant 0 : i32
    %c0_i32_0 = arith.constant 0 : i32
    %c0_i32_1 = arith.constant 0 : i32
    return %c0_i32, %c0_i32_0 : i32, i32
  }
  func.func @transform_2(%arg0: i32) -> (i32, i32) {
    %c0_i32 = arith.constant 0 : i32
    %c0_i32_0 = arith.constant 0 : i32
    %c0_i32_1 = arith.constant 0 : i32
    return %c0_i32, %c0_i32_0 : i32, i32
  }
  func.func @transform_3(%arg0: i32) -> (i32, i32) {
    %c0_i32 = arith.constant 0 : i32
    %c0_i32_0 = arith.constant 0 : i32
    %c0_i32_1 = arith.constant 0 : i32
    return %c0_i32, %c0_i32_0 : i32, i32
  }
  func.func @transform_4(%arg0: i32) -> (i32, i32) {
    %c0_i32 = arith.constant 0 : i32
    %c0_i32_0 = arith.constant 0 : i32
    %c0_i32_1 = arith.constant 0 : i32
    return %c0_i32, %c0_i32_0 : i32, i32
  }
  func.func @transform_5(%arg0: i32) -> (i32, i32) {
    %c0_i32 = arith.constant 0 : i32
    %c0_i32_0 = arith.constant 0 : i32
    return %arg0, %c0_i32 : i32, i32
  }
  func.func @transform_6(%arg0: i32) -> (i32, i32, i32) {
    %c0_i32 = arith.constant 0 : i32
    %c0_i32_0 = arith.constant 0 : i32
    %c0_i32_1 = arith.constant 0 : i32
    return %c0_i32, %arg0, %c0_i32_0 : i32, i32, i32
  }
}

</mosaic_0001>

<llo_original>
// kernel: tpu_custom_call.1
$region0: #{tpu_custom_call.1}
  #allocation0 [shape = 'u32[]', space=smem, size = 0x4, offset = 0x4, fixed_abs, tag = 'smem constant byte address 0x4 - core index']
  #allocation1 [shape = 'u32[144,128]{1,0:T(1,128)}', space=vmem, size = 0x12000, scoped, tag = 'internal scratch']
  %s0 = inlined_call_operand.vmem [shape: f32[8,16], index: 0, kind: input, shape index: {}]
  %s1 = inlined_call_operand.vmem [shape: f32[16,128], index: 1, kind: input, shape index: {}]
  %s2 = inlined_call_operand.vmem [shape: f32[1,128], index: 2, kind: input, shape index: {}]
  %s3 = inlined_call_operand.vmem [shape: f32[128,8], index: 3, kind: input, shape index: {}]
  %s4 = inlined_call_operand.vmem [shape: f32[1,8], index: 4, kind: input, shape index: {}]
  %s5 = inlined_call_operand.vmem [shape: f32[8,4], index: 5, kind: input, shape index: {}]
  %s6 = inlined_call_operand.vmem [shape: f32[3,8,4], index: 6, kind: output, shape index: {}]
  %s7 = sld [smem:[#allocation0]]
  $region34: #{tpu_custom_call.1} parent=0
    _
  %s9 = ssub.s32 1, %s7
  %s10 = scalar_select 0, %s9, %s7
  // Predicated region
  $region2: #{tpu_custom_call.1} parent=0 // pred_check
    _
  $region3: #{tpu_custom_call.1} parent=0 // pred_check_branch
    %12 = sbr.rel (0) target = $region5
  $region4: #{tpu_custom_call.1} parent=0 // pred_region
    _
  $region5: #{tpu_custom_call.1} parent=0 // pred_fallthru
    _
  // Predicated region
  $region6: #{tpu_custom_call.1} parent=0 // pred_check
    _
  $region7: #{tpu_custom_call.1} parent=0 // pred_check_branch
    %14 = sbr.rel (0) target = $region9
  $region8: #{tpu_custom_call.1} parent=0 // pred_region
    _
  $region9: #{tpu_custom_call.1} parent=0 // pred_fallthru
    _
  // Predicated region
  $region10: #{tpu_custom_call.1} parent=0 // pred_check
    _
  $region11: #{tpu_custom_call.1} parent=0 // pred_check_branch
    %16 = sbr.rel (0) target = $region13
  $region12: #{tpu_custom_call.1} parent=0 // pred_region
    _
  $region13: #{tpu_custom_call.1} parent=0 // pred_fallthru
    _
  // Predicated region
  $region14: #{tpu_custom_call.1} parent=0 // pred_check
    _
  $region15: #{tpu_custom_call.1} parent=0 // pred_check_branch
    %18 = sbr.rel (0) target = $region17
  $region16: #{tpu_custom_call.1} parent=0 // pred_region
    _
  $region17: #{tpu_custom_call.1} parent=0 // pred_fallthru
    _
  // Predicated region
  $region18: #{tpu_custom_call.1} parent=0 // pred_check
    _
  $region19: #{tpu_custom_call.1} parent=0 // pred_check_branch
    %20 = sbr.rel (0) target = $region21
  $region20: #{tpu_custom_call.1} parent=0 // pred_region
    _
  $region21: #{tpu_custom_call.1} parent=0 // pred_fallthru
    _
  // Predicated region
  $region22: #{tpu_custom_call.1} parent=0 // pred_check
    _
  $region23: #{tpu_custom_call.1} parent=0 // pred_check_branch
    %22 = sbr.rel (0) target = $region25
  $region24: #{tpu_custom_call.1} parent=0 // pred_region
    _
  $region25: #{tpu_custom_call.1} parent=0 // pred_fallthru
    _
  %v23 = vld [vmem:[%s0] sm:$0xff]
  %v24 = vld [vmem:[%s1] sm:$0xff]
  %v25 = vld [vmem:[%s1 + $0x8] sm:$0xff]
  %v26 = vld [vmem:[%s2] sm:$0x1]
  %v28 = vlaneseq
  %v29 = vshrl.u32 %v28, 7
  %v30 = vsub.s32 0, %v29
  %v31 = vrot.slane %v26, %v30
  %vm33 = vcmask 130048
  %v35 = vsel %vm33, %v23, 0
  %37 = vmatprep.subr.mxu0 0.0
  %38 = vmatpush1.msra.mxu0 %v24
  %39 = vmatprep.subr.mxu0 0.0
  %40 = vmatpush1.msra.mxu0 %v25
  %41 = vmatprep.subr.mxu0 0.0
  %42 = vmatpush1.msra.mxu0 0.0
  %43 = vmatprep.subr.mxu0 0.0
  %44 = vmatpush1.msra.mxu0 0.0
  %45 = vmatprep.subr.mxu0 0.0
  %46 = vmatpush1.msra.mxu0 0.0
  %47 = vmatprep.subr.mxu0 0.0
  %48 = vmatpush1.msra.mxu0 0.0
  %49 = vmatprep.subr.mxu0 0.0
  %50 = vmatpush1.msra.mxu0 0.0
  %51 = vmatprep.subr.mxu0 0.0
  %52 = vmatpush1.msra.mxu0 0.0
  %53 = vmatprep.subr.mxu0 0.0
  %54 = vmatpush1.msra.mxu0 0.0
  %55 = vmatprep.subr.mxu0 0.0
  %56 = vmatpush1.msra.mxu0 0.0
  %57 = vmatprep.subr.mxu0 0.0
  %58 = vmatpush1.msra.mxu0 0.0
  %59 = vmatprep.subr.mxu0 0.0
  %60 = vmatpush1.msra.mxu0 0.0
  %61 = vmatprep.subr.mxu0 0.0
  %62 = vmatpush1.msra.mxu0 0.0
  %63 = vmatprep.subr.mxu0 0.0
  %64 = vmatpush1.msra.mxu0 0.0
  %65 = vmatprep.subr.mxu0 0.0
  %66 = vmatpush1.msra.mxu0 0.0
  %67 = vmatprep.subr.mxu0 0.0
  %68 = vmatpush1.msra.mxu0 0.0
  %69 = vmatprep.subr.mxu0 0.0
  %70 = vmatpush1.msra.mxu0 0.0
  %71 = vmatprep.subr.mxu0 0.0
  %72 = vmatpush1.msra.mxu0 0.0
  %73 = vmatprep.subr.mxu0 0.0
  %74 = vmatpush1.msra.mxu0 0.0
  %75 = vmatprep.subr.mxu0 0.0
  %76 = vmatpush1.msra.mxu0 0.0
  %77 = vmatprep.subr.mxu0 0.0
  %78 = vmatpush1.msra.mxu0 0.0
  %79 = vmatprep.subr.mxu0 0.0
  %80 = vmatpush1.msra.mxu0 0.0
  %81 = vmatprep.subr.mxu0 0.0
  %82 = vmatpush1.msra.mxu0 0.0
  %83 = vmatprep.subr.mxu0 0.0
  %84 = vmatpush1.msra.mxu0 0.0
  %85 = vmatprep.subr.mxu0 0.0
  %86 = vmatpush1.msra.mxu0 0.0
  %87 = vmatprep.subr.mxu0 0.0
  %88 = vmatpush1.msra.mxu0 0.0
  %89 = vmatprep.subr.mxu0 0.0
  %90 = vmatpush1.msra.mxu0 0.0
  %91 = vmatprep.subr.mxu0 0.0
  %92 = vmatpush1.msra.mxu0 0.0
  %93 = vmatprep.subr.mxu0 0.0
  %94 = vmatpush1.msra.mxu0 0.0
  %95 = vmatprep.subr.mxu0 0.0
  %96 = vmatpush1.msra.mxu0 0.0
  %97 = vmatprep.subr.mxu0 0.0
  %98 = vmatpush1.msra.mxu0 0.0
  %99 = vmatprep.subr.mxu0 0.0
  %100 = vmatpush1.msra.mxu0 0.0
  %101 = vmatprep.mubr.f32.mxu0 0.0
  %102 = vmatmul.mubr.f32.gmra.mrb[0].mxu0 %v35
  %v103 = vpop.f32.mrb[0].mxu0
  %v104 = vadd.f32 %v31, %v103
  %v105 = vpop.f32.mrb[0].mxu0
  %106 = vdwg.mxu0
  %v107 = vmax.f32 %v104, 0.0
  %v108 = vld [vmem:[%s3] sm:$0xff]
  %v109 = vld [vmem:[%s3 + $0x8] sm:$0xff]
  %v110 = vld [vmem:[%s3 + $0x10] sm:$0xff]
  %v111 = vld [vmem:[%s3 + $0x18] sm:$0xff]
  %v112 = vld [vmem:[%s3 + $0x20] sm:$0xff]
  %v113 = vld [vmem:[%s3 + $0x28] sm:$0xff]
  %v114 = vld [vmem:[%s3 + $0x30] sm:$0xff]
  %v115 = vld [vmem:[%s3 + $0x38] sm:$0xff]
  %v116 = vld [vmem:[%s3 + $0x40] sm:$0xff]
  %v117 = vld [vmem:[%s3 + $0x48] sm:$0xff]
  %v118 = vld [vmem:[%s3 + $0x50] sm:$0xff]
  %v119 = vld [vmem:[%s3 + $0x58] sm:$0xff]
  %v120 = vld [vmem:[%s3 + $0x60] sm:$0xff]
  %v121 = vld [vmem:[%s3 + $0x68] sm:$0xff]
  %v122 = vld [vmem:[%s3 + $0x70] sm:$0xff]
  %v123 = vld [vmem:[%s3 + $0x78] sm:$0xff]
  %v124 = vld [vmem:[%s4] sm:$0x1]
  %v126 = vlaneseq
  %v127 = vshrl.u32 %v126, 7
  %v128 = vsub.s32 0, %v127
  %v129 = vrot.slane %v124, %v128
  %131 = vmatprep.subr.mxu0 0.0
  %132 = vmatpush1.msra.mxu0 %v108
  %133 = vmatprep.subr.mxu0 0.0
  %134 = vmatpush1.msra.mxu0 %v109
  %135 = vmatprep.subr.mxu0 0.0
  %136 = vmatpush1.msra.mxu0 %v110
  %137 = vmatprep.subr.mxu0 0.0
  %138 = vmatpush1.msra.mxu0 %v111
  %139 = vmatprep.subr.mxu0 0.0
  %140 = vmatpush1.msra.mxu0 %v112
  %141 = vmatprep.subr.mxu0 0.0
  %142 = vmatpush1.msra.mxu0 %v113
  %143 = vmatprep.subr.mxu0 0.0
  %144 = vmatpush1.msra.mxu0 %v114
  %145 = vmatprep.subr.mxu0 0.0
  %146 = vmatpush1.msra.mxu0 %v115
  %147 = vmatprep.subr.mxu0 0.0
  %148 = vmatpush1.msra.mxu0 %v116
  %149 = vmatprep.subr.mxu0 0.0
  %150 = vmatpush1.msra.mxu0 %v117
  %151 = vmatprep.subr.mxu0 0.0
  %152 = vmatpush1.msra.mxu0 %v118
  %153 = vmatprep.subr.mxu0 0.0
  %154 = vmatpush1.msra.mxu0 %v119
  %155 = vmatprep.subr.mxu0 0.0
  %156 = vmatpush1.msra.mxu0 %v120
  %157 = vmatprep.subr.mxu0 0.0
  %158 = vmatpush1.msra.mxu0 %v121
  %159 = vmatprep.subr.mxu0 0.0
  %160 = vmatpush1.msra.mxu0 %v122
  %161 = vmatprep.subr.mxu0 0.0
  %162 = vmatpush1.msra.mxu0 %v123
  %163 = vmatprep.subr.mxu0 0.0
  %164 = vmatpush1.msra.mxu0 0.0
  %165 = vmatprep.subr.mxu0 0.0
  %166 = vmatpush1.msra.mxu0 0.0
  %167 = vmatprep.subr.mxu0 0.0
  %168 = vmatpush1.msra.mxu0 0.0
  %169 = vmatprep.subr.mxu0 0.0
  %170 = vmatpush1.msra.mxu0 0.0
  %171 = vmatprep.subr.mxu0 0.0
  %172 = vmatpush1.msra.mxu0 0.0
  %173 = vmatprep.subr.mxu0 0.0
  %174 = vmatpush1.msra.mxu0 0.0
  %175 = vmatprep.subr.mxu0 0.0
  %176 = vmatpush1.msra.mxu0 0.0
  %177 = vmatprep.subr.mxu0 0.0
  %178 = vmatpush1.msra.mxu0 0.0
  %179 = vmatprep.subr.mxu0 0.0
  %180 = vmatpush1.msra.mxu0 0.0
  %181 = vmatprep.subr.mxu0 0.0
  %182 = vmatpush1.msra.mxu0 0.0
  %183 = vmatprep.subr.mxu0 0.0
  %184 = vmatpush1.msra.mxu0 0.0
  %185 = vmatprep.subr.mxu0 0.0
  %186 = vmatpush1.msra.mxu0 0.0
  %187 = vmatprep.subr.mxu0 0.0
  %188 = vmatpush1.msra.mxu0 0.0
  %189 = vmatprep.subr.mxu0 0.0
  %190 = vmatpush1.msra.mxu0 0.0
  %191 = vmatprep.subr.mxu0 0.0
  %192 = vmatpush1.msra.mxu0 0.0
  %193 = vmatprep.subr.mxu0 0.0
  %194 = vmatpush1.msra.mxu0 0.0
  %195 = vmatprep.mubr.f32.mxu0 0.0
  %196 = vmatmul.mubr.f32.gmra.mrb[0].mxu0 %v107
  %v197 = vpop.f32.mrb[0].mxu0
  %v198 = vadd.f32 %v129, %v197
  %v199 = vpop.f32.mrb[0].mxu0
  %200 = vdwg.mxu0
  %v201 = vtanh.pop %v198
  %v202 = vadd.f32 %v201, 1.0
  %v203 = vmul.f32 %v202, 10.0
  %v204 = vadd.f32 %v203, -20.0
  %v205 = vmul.f32 %v204, 1.442695
  %v206 = vpow.pop %v205
  %v207 = vld [vmem:[%s5] sm:$0xff]
  %209 = vrot.lane.b32.xlu0 %v207, 4
  %v210 = vpop.permute.xlu0 %209
  %v212 = vmul.f32 %v206, %v210
  %214 = vrot.lane.b32.xlu0 %v212, 124
  %v215 = vpop.permute.xlu0 %214
  %v217 = vadd.f32 %v201, %v215
  %vm218 = vcmask 31744
  %219 = vst.msk [vmem:[%s6] sm:$0xff] %vm218, %v217
  %s220 = scalar_lea.vmem %s6, 8
  %221 = vst.msk [vmem:[%s220] sm:$0xff] %vm218, %v201
  %223 = vrot.lane.b32.xlu0 %v206, 124
  %v224 = vpop.permute.xlu0 %223
  %s226 = scalar_lea.vmem %s6, 16
  %227 = vst.msk [vmem:[%s226] sm:$0xff] %vm218, %v224
  // Predicated region
  $region26: #{tpu_custom_call.1} parent=0 // pred_check
    _
  $region27: #{tpu_custom_call.1} parent=0 // pred_check_branch
    %229 = sbr.rel (0) target = $region29
  $region28: #{tpu_custom_call.1} parent=0 // pred_region
    _
  $region29: #{tpu_custom_call.1} parent=0 // pred_fallthru
    _
  // Predicated region
  $region30: #{tpu_custom_call.1} parent=0 // pred_check
    _
  $region31: #{tpu_custom_call.1} parent=0 // pred_check_branch
    %231 = sbr.rel (0) target = $region33
  $region32: #{tpu_custom_call.1} parent=0 // pred_region
    _
  $region33: #{tpu_custom_call.1} parent=0 // pred_fallthru
    _

</llo_original>
